<compile_context>
chip_gen: v7x
topology: tpu7x:2x2x1
jax: 0.10.0
libtpu: 0.0.40
codegen_flags: <defaults>
</compile_context>

<pallas_src>
import functools

import jax
import jax.numpy as jnp
from jax.experimental import pallas as pl
from jax.experimental.pallas import tpu as pltpu

_BN_EPS = 1e-5  # nn.BatchNorm2d default


# ----------------------------- Pallas kernel --------------------------------

def _adown_kernel(s1b_ref, s1h_ref, x2p_ref, w2_ref, w1_ref, b_ref, o_ref):
    """One (batch, row-block) step.

    s1b_ref : (1, TH,   Wo+1, 4*ch) bf16  space-to-depth avg-x1 body rows
    s1h_ref : (1, 1,    Wo+1, 4*ch) bf16  halo row (first row of next block)
    x2p_ref : (1, TH,   Wo,   ch)   bf16  max-pooled avg-x2 half
    w2_ref  : (4, 4*ch, c)          bf16  cv1 weights, one (4ch,c) mat per 2x2 tap
    w1_ref  : (ch, c)               bf16  cv2 (1x1) weights
    b_ref   : (1, 2*c)              f32   folded-BN biases [cv1 | cv2]
    o_ref   : (1, TH, Wo, 2*c)            concatenated output block
    """
    _, th, wo1, c4 = s1b_ref.shape
    wo = wo1 - 1
    ch = x2p_ref.shape[-1]
    c = w1_ref.shape[-1]
    m = th * wo

    # Haloed space-to-depth rows for this block: (TH+1, Wo+1, 4*ch) in VMEM.
    s1 = jnp.concatenate([s1b_ref[0], s1h_ref[0]], axis=0)

    # cv1: 3x3/stride-2 conv == 2x2/stride-1 conv over space-to-depth taps.
    # Four contiguous-slice MXU matmuls, f32 accumulation.
    acc1 = None
    for dh in range(2):
        for dw in range(2):
            tap = s1[dh:dh + th, dw:dw + wo, :].reshape(m, c4)
            d = jnp.dot(tap, w2_ref[2 * dh + dw],
                        preferred_element_type=jnp.float32)
            acc1 = d if acc1 is None else acc1 + d

    # cv2: 1x1 conv on the max-pooled half.
    acc2 = jnp.dot(x2p_ref[0].reshape(m, ch), w1_ref[...],
                   preferred_element_type=jnp.float32)

    b = b_ref[...]                               # (1, 2c) f32
    y1 = acc1 + b[:, :c]
    y2 = acc2 + b[:, c:]
    y = jnp.concatenate([y1, y2], axis=-1)       # torch.cat folded into the store
    y = y * jax.nn.sigmoid(y)                    # SiLU in f32 (EUP sigmoid)
    o_ref[...] = y.reshape(1, th, wo, 2 * c).astype(o_ref.dtype)


def _largest_divisor_leq(n, target):
    t = max(1, min(int(target), int(n)))
    while n % t:
        t -= 1
    return t


def adown_pallas(s1, x2p, w2, w1, b, *, ho, wo, row_tile=16,
                 out_dtype=jnp.bfloat16):
    """s1: (N, Ho+1, Wo+1, 4*ch) bf16 space-to-depth padded avg-x1,
    x2p: (N, Ho, Wo, ch) bf16 max-pooled avg-x2, packed weights/bias -> NHWC out."""
    n = s1.shape[0]
    c4 = s1.shape[-1]
    ch = x2p.shape[-1]
    c = w1.shape[-1]

    # Row tile must divide Ho so every block is exact (no ragged/clamped reads).
    th = _largest_divisor_leq(ho, row_tile)
    n_r = ho // th

    out_isz = jnp.dtype(out_dtype).itemsize
    blk_bytes = (2 * th * (wo + 1) * c4 * 2          # s1 body (double buffered)
                 + 2 * (wo + 1) * c4 * 2             # halo row
                 + 2 * th * wo * ch * 2              # pooled x2
                 + w2.size * 2 + w1.size * 2 + b.size * 4   # single buffered
                 + 2 * th * wo * 2 * c * out_isz)    # output block
    # Explicit VMEM budget; cap at 64 MiB so the same plan fits v7x.
    vmem_limit = int(min(64 * 2 ** 20, max(32 * 2 ** 20, 3 * blk_bytes)))

    resident = dict(pipeline_mode=pl.Buffered(1))    # constant blocks: 1 buffer

    return pl.pallas_call(
        _adown_kernel,
        out_shape=jax.ShapeDtypeStruct((n, ho, wo, 2 * c), out_dtype),
        grid=(n, n_r),
        in_specs=[
            # body rows [r*TH, r*TH + TH)
            pl.BlockSpec((1, th, wo + 1, c4), lambda i, r: (i, r, 0, 0)),
            # halo row (r+1)*TH  (block size 1 => block index == row index)
            pl.BlockSpec((1, 1, wo + 1, c4),
                         lambda i, r: (i, (r + 1) * th, 0, 0)),
            pl.BlockSpec((1, th, wo, ch), lambda i, r: (i, r, 0, 0)),
            pl.BlockSpec(w2.shape, lambda i, r: (0, 0, 0), **resident),
            pl.BlockSpec(w1.shape, lambda i, r: (0, 0), **resident),
            pl.BlockSpec(b.shape, lambda i, r: (0, 0), **resident),
        ],
        out_specs=pl.BlockSpec((1, th, wo, 2 * c), lambda i, r: (i, r, 0, 0)),
        compiler_params=pltpu.CompilerParams(
            dimension_semantics=("parallel", "parallel"),
            vmem_limit_bytes=vmem_limit),
    )(s1, s1, x2p, w2, w1, b)


# ----------------------------- JAX glue (NHWC, bf16) -------------------------

def _maxpool3x3_s2_p1(x):
    # F.max_pool2d(x, 3, 2, 1) -- padding behaves like -inf
    return jax.lax.reduce_window(
        x, jnp.asarray(-jnp.inf, x.dtype), jax.lax.max,
        (1, 3, 3, 1), (1, 2, 2, 1), [(0, 0), (1, 1), (1, 1), (0, 0)])


def _space_to_depth2(x):
    n, h, w, c = x.shape
    x = x.reshape(n, h // 2, 2, w // 2, 2, c)
    x = jnp.transpose(x, (0, 1, 3, 2, 4, 5))
    return x.reshape(n, h // 2, w // 2, 4 * c)       # channel order (dr, dc, c)


def adown_forward_nhwc(params, x_nhwc, *, row_tile=16, out_dtype=jnp.bfloat16):
    n, h, w, c1 = x_nhwc.shape
    assert h % 2 == 0 and w % 2 == 0 and c1 % 2 == 0
    ch = c1 // 2
    ho, wo = h // 2, w // 2

    x = x_nhwc.astype(jnp.bfloat16)                  # bf16 BEFORE any expansion
    # avg_pool2d(x, 2, 1, 0): 4 shifted adds (elementwise, fuses with the pads)
    xa = 0.25 * (x[:, :-1, :-1, :] + x[:, 1:, :-1, :]
                 + x[:, :-1, 1:, :] + x[:, 1:, 1:, :])
    x1, x2 = xa[..., :ch], xa[..., ch:]              # x.chunk(2, 1)

    # cv1 branch: zero-pad (conv pad=1, plus 1 row/col so space-to-depth is even)
    xp1 = jnp.pad(x1, ((0, 0), (1, 2), (1, 2), (0, 0)))
    s1 = _space_to_depth2(xp1)                       # (n, ho+1, wo+1, 4*ch)

    # cv2 branch: max_pool2d(x2, 3, 2, 1) stays in XLA (output is only ho*wo*ch)
    x2p = _maxpool3x3_s2_p1(x2)                      # (n, ho, wo, ch)

    return adown_pallas(s1, x2p, params['w2'], params['w1'], params['b'],
                        ho=ho, wo=wo, row_tile=row_tile, out_dtype=out_dtype)


def adown_forward(params, x_nchw, *, row_tile=16, out_dtype=jnp.bfloat16):
    # NCHW boundary for PyTorch parity; an NHWC pipeline calls adown_forward_nhwc
    # directly and both transposes disappear.
    x = jnp.transpose(x_nchw, (0, 2, 3, 1))
    y = adown_forward_nhwc(params, x, row_tile=row_tile, out_dtype=out_dtype)
    return jnp.transpose(y, (0, 3, 1, 2))


# ----------------------------- params (BN folded, pre-laid-out) --------------

def _make_conv_bn(key, c_in, c_out, k):
    """Deterministic Conv2d(bias=False)+BatchNorm2d, BN folded with running stats."""
    k1, k2, k3, k4, k5 = jax.random.split(key, 5)
    w = 0.1 * jax.random.normal(k1, (c_out, c_in, k, k), jnp.float32)
    gamma = 1.0 + 0.1 * jax.random.normal(k2, (c_out,), jnp.float32)
    beta = 0.1 * jax.random.normal(k3, (c_out,), jnp.float32)
    mean = 0.1 * jax.random.normal(k4, (c_out,), jnp.float32)
    var = 0.5 + jax.random.uniform(k5, (c_out,), jnp.float32)
    scale = gamma / jnp.sqrt(var + _BN_EPS)
    wf = w * scale[:, None, None, None]              # [Cout, Cin, k, k]
    bf = beta - mean * scale                         # [Cout]
    return wf, bf


def init_adown(key, c1, c2):
    ch, c = c1 // 2, c2 // 2
    k1, k2 = jax.random.split(key)
    wf1, bf1 = _make_conv_bn(k1, ch, c, 3)           # cv1: 3x3, s=2, p=1
    wf2, bf2 = _make_conv_bn(k2, ch, c, 1)           # cv2: 1x1

    # Repack cv1 for the space-to-depth formulation (done once, at init):
    # w2[dh*2+dw] is the (4*ch, c) weight of 2x2-tap (dh, dw); channel groups
    # are ordered (dr, dc, cin) to match _space_to_depth2.
    wk = jnp.transpose(wf1, (2, 3, 1, 0))                    # [kh, kw, ci, co]
    w2 = jnp.zeros((2, 2, 2, 2, ch, c), jnp.float32)          # [dh,dw,dr,dc,ci,co]
    w2 = w2.at[0, 0].set(wk[0:2, 0:2])                        # kh=dr,  kw=dc
    w2 = w2.at[0, 1, :, 0].set(wk[0:2, 2])                    # kh=dr,  kw=2 (dc=0)
    w2 = w2.at[1, 0, 0].set(wk[2, 0:2])                       # kh=2,   kw=dc (dr=0)
    w2 = w2.at[1, 1, 0, 0].set(wk[2, 2])                      # kh=2,   kw=2
    w2 = w2.reshape(4, 4 * ch, c)

    w1 = wf2[:, :, 0, 0].T                                    # (ch, c)
    return {
        'w2': w2.astype(jnp.bfloat16),                        # [4, 4*ch, c]
        'w1': w1.astype(jnp.bfloat16),                        # [ch, c]
        'b': jnp.concatenate([bf1, bf2]).reshape(1, 2 * c).astype(jnp.float32),
        # raw folded conv weights, kept only for the pure-JAX reference
        'wf1': wf1, 'bf1': bf1, 'wf2': wf2, 'bf2': bf2,
    }


# ----------------------------- pure-JAX reference ----------------------------

def _ref_conv_bn_silu(x_nhwc, w_oihw, b, *, stride, pad):
    dn = jax.lax.conv_dimension_numbers(x_nhwc.shape, w_oihw.shape,
                                        ('NHWC', 'OIHW', 'NHWC'))
    y = jax.lax.conv_general_dilated(x_nhwc, w_oihw, (stride, stride),
                                     [(pad, pad), (pad, pad)],
                                     dimension_numbers=dn,
                                     precision=jax.lax.Precision.HIGHEST)
    y = y + b
    return y * jax.nn.sigmoid(y)


def adown_reference(params, x_nchw):
    x = jnp.transpose(x_nchw, (0, 2, 3, 1))
    ch = x.shape[-1] // 2
    xa = 0.25 * jax.lax.reduce_window(x, 0.0, jax.lax.add,
                                      (1, 2, 2, 1), (1, 1, 1, 1), 'VALID')
    x1, x2 = xa[..., :ch], xa[..., ch:]
    y1 = _ref_conv_bn_silu(x1, params['wf1'], params['bf1'], stride=2, pad=1)
    x2p = _maxpool3x3_s2_p1(x2)
    y2 = _ref_conv_bn_silu(x2p, params['wf2'], params['bf2'], stride=1, pad=0)
    out = jnp.concatenate([y1, y2], axis=-1)
    return jnp.transpose(out, (0, 3, 1, 2))


# ----------------------------- main -------------------------------------------

if __name__ == "__main__":
    key = jax.random.PRNGKey(0)
    kx, kp = jax.random.split(key)

    c1, c2 = 8, 8
    x = jax.random.normal(kx, (2, c1, 16, 16), jnp.float32)   # NCHW, like PyTorch
    params = init_adown(kp, c1, c2)

    # row_tile=4 -> Ho=8 splits into 2 row blocks; with N=2 the parallel grid has
    # 4 steps, so the tiled/pipelined (and halo) path is exercised at toy size.
    fwd = jax.jit(functools.partial(adown_forward, row_tile=4))
    out = jax.block_until_ready(fwd(params, x))

    ref = jax.block_until_ready(jax.jit(adown_reference)(params, x))

    assert out.shape == (2, c2, 8, 8), out.shape
    max_err = float(jnp.max(jnp.abs(out.astype(jnp.float32) - ref)))
    # bf16 activations/weights/output with f32 accumulation vs f32 HIGHEST ref.
    assert max_err < 2e-2, f"max abs err {max_err}"

    print("KERNEL_OK")
</pallas_src>

<mosaic_0001>
module attributes {stable_mosaic.version = 11 : i64} {
  func.func @_adown_kernel(%arg0: i32, %arg1: i32, %arg2: memref<1x4x9x16xbf16, #tpu.memory_space<vmem>>, %arg3: memref<1x1x9x16xbf16, #tpu.memory_space<vmem>>, %arg4: memref<1x4x8x4xbf16, #tpu.memory_space<vmem>>, %arg5: memref<4x16x4xbf16, #tpu.memory_space<vmem>>, %arg6: memref<4x4xbf16, #tpu.memory_space<vmem>>, %arg7: memref<1x8xf32, #tpu.memory_space<vmem>>, %arg8: memref<1x4x8x8xbf16, #tpu.memory_space<vmem>>) attributes {dimension_semantics = [#tpu.dimension_semantics<parallel>, #tpu.dimension_semantics<parallel>], iteration_bounds = array<i64: 2, 2>, scalar_prefetch = 0 : i64, scratch_operands = 0 : i64, tpu.core_type = #tpu.core_type<tc>, window_params = [{transform_indices = @transform_0, window_bounds = array<i64: 1, 4, 9, 16>}, {transform_indices = @transform_1, window_bounds = array<i64: 1, 1, 9, 16>}, {transform_indices = @transform_2, window_bounds = array<i64: 1, 4, 8, 4>}, {pipeline_mode = #tpu.pipeline_mode<synchronous>, transform_indices = @transform_3, window_bounds = array<i64: 4, 16, 4>}, {pipeline_mode = #tpu.pipeline_mode<synchronous>, transform_indices = @transform_4, window_bounds = array<i64: 4, 4>}, {pipeline_mode = #tpu.pipeline_mode<synchronous>, transform_indices = @transform_5, window_bounds = array<i64: 1, 8>}, {transform_indices = @transform_6, window_bounds = array<i64: 1, 4, 8, 8>}]} {
    %c0 = arith.constant 0 : index
    %c0_0 = arith.constant 0 : index
    %c0_1 = arith.constant 0 : index
    %c0_2 = arith.constant 0 : index
    %0 = vector.load %arg2[%c0, %c0_0, %c0_1, %c0_2] : memref<1x4x9x16xbf16, #tpu.memory_space<vmem>>, vector<1x4x9x16xbf16>
    %1 = vector.shape_cast %0 : vector<1x4x9x16xbf16> to vector<4x9x16xbf16>
    %c0_3 = arith.constant 0 : index
    %c0_4 = arith.constant 0 : index
    %c0_5 = arith.constant 0 : index
    %c0_6 = arith.constant 0 : index
    %2 = vector.load %arg3[%c0_3, %c0_4, %c0_5, %c0_6] : memref<1x1x9x16xbf16, #tpu.memory_space<vmem>>, vector<1x1x9x16xbf16>
    %3 = vector.shape_cast %2 : vector<1x1x9x16xbf16> to vector<1x9x16xbf16>
    %4 = tpu.concatenate %1, %3 in 0 : vector<4x9x16xbf16>, vector<1x9x16xbf16> -> vector<5x9x16xbf16>
    %5 = vector.extract_strided_slice %4 {offsets = [0, 0, 0], sizes = [4, 8, 16], strides = [1, 1, 1]} : vector<5x9x16xbf16> to vector<4x8x16xbf16>
    %6 = vector.shape_cast %5 : vector<4x8x16xbf16> to vector<32x16xbf16>
    %c0_7 = arith.constant 0 : index
    %c0_8 = arith.constant 0 : index
    %c0_9 = arith.constant 0 : index
    %7 = vector.load %arg5[%c0_7, %c0_8, %c0_9] : memref<4x16x4xbf16, #tpu.memory_space<vmem>>, vector<1x16x4xbf16>
    %8 = vector.shape_cast %7 : vector<1x16x4xbf16> to vector<16x4xbf16>
    %cst = arith.constant dense<0.000000e+00> : vector<32x4xf32>
    %9 = tpu.matmul %6, %8, %cst {dimension_numbers = #tpu.dot_dimension_numbers<[1], [0], [0], [1], [0, 0, 1, 1], [], []>} : vector<32x16xbf16>, vector<16x4xbf16>, vector<32x4xf32> -> vector<32x4xf32>
    %10 = vector.extract_strided_slice %4 {offsets = [0, 1, 0], sizes = [4, 8, 16], strides = [1, 1, 1]} : vector<5x9x16xbf16> to vector<4x8x16xbf16>
    %11 = vector.shape_cast %10 : vector<4x8x16xbf16> to vector<32x16xbf16>
    %c1 = arith.constant 1 : index
    %c0_10 = arith.constant 0 : index
    %c0_11 = arith.constant 0 : index
    %12 = vector.load %arg5[%c1, %c0_10, %c0_11] : memref<4x16x4xbf16, #tpu.memory_space<vmem>>, vector<1x16x4xbf16>
    %13 = vector.shape_cast %12 : vector<1x16x4xbf16> to vector<16x4xbf16>
    %cst_12 = arith.constant dense<0.000000e+00> : vector<32x4xf32>
    %14 = tpu.matmul %11, %13, %cst_12 {dimension_numbers = #tpu.dot_dimension_numbers<[1], [0], [0], [1], [0, 0, 1, 1], [], []>} : vector<32x16xbf16>, vector<16x4xbf16>, vector<32x4xf32> -> vector<32x4xf32>
    %15 = arith.addf %9, %14 : vector<32x4xf32>
    %16 = vector.extract_strided_slice %4 {offsets = [1, 0, 0], sizes = [4, 8, 16], strides = [1, 1, 1]} : vector<5x9x16xbf16> to vector<4x8x16xbf16>
    %17 = vector.shape_cast %16 : vector<4x8x16xbf16> to vector<32x16xbf16>
    %c2 = arith.constant 2 : index
    %c0_13 = arith.constant 0 : index
    %c0_14 = arith.constant 0 : index
    %18 = vector.load %arg5[%c2, %c0_13, %c0_14] : memref<4x16x4xbf16, #tpu.memory_space<vmem>>, vector<1x16x4xbf16>
    %19 = vector.shape_cast %18 : vector<1x16x4xbf16> to vector<16x4xbf16>
    %cst_15 = arith.constant dense<0.000000e+00> : vector<32x4xf32>
    %20 = tpu.matmul %17, %19, %cst_15 {dimension_numbers = #tpu.dot_dimension_numbers<[1], [0], [0], [1], [0, 0, 1, 1], [], []>} : vector<32x16xbf16>, vector<16x4xbf16>, vector<32x4xf32> -> vector<32x4xf32>
    %21 = arith.addf %15, %20 : vector<32x4xf32>
    %22 = vector.extract_strided_slice %4 {offsets = [1, 1, 0], sizes = [4, 8, 16], strides = [1, 1, 1]} : vector<5x9x16xbf16> to vector<4x8x16xbf16>
    %23 = vector.shape_cast %22 : vector<4x8x16xbf16> to vector<32x16xbf16>
    %c3 = arith.constant 3 : index
    %c0_16 = arith.constant 0 : index
    %c0_17 = arith.constant 0 : index
    %24 = vector.load %arg5[%c3, %c0_16, %c0_17] : memref<4x16x4xbf16, #tpu.memory_space<vmem>>, vector<1x16x4xbf16>
    %25 = vector.shape_cast %24 : vector<1x16x4xbf16> to vector<16x4xbf16>
    %cst_18 = arith.constant dense<0.000000e+00> : vector<32x4xf32>
    %26 = tpu.matmul %23, %25, %cst_18 {dimension_numbers = #tpu.dot_dimension_numbers<[1], [0], [0], [1], [0, 0, 1, 1], [], []>} : vector<32x16xbf16>, vector<16x4xbf16>, vector<32x4xf32> -> vector<32x4xf32>
    %27 = arith.addf %21, %26 : vector<32x4xf32>
    %c0_19 = arith.constant 0 : index
    %c0_20 = arith.constant 0 : index
    %c0_21 = arith.constant 0 : index
    %c0_22 = arith.constant 0 : index
    %28 = vector.load %arg4[%c0_19, %c0_20, %c0_21, %c0_22] : memref<1x4x8x4xbf16, #tpu.memory_space<vmem>>, vector<1x4x8x4xbf16>
    %29 = vector.shape_cast %28 : vector<1x4x8x4xbf16> to vector<4x8x4xbf16>
    %30 = vector.shape_cast %29 : vector<4x8x4xbf16> to vector<32x4xbf16>
    %c0_23 = arith.constant 0 : index
    %c0_24 = arith.constant 0 : index
    %31 = vector.load %arg6[%c0_23, %c0_24] : memref<4x4xbf16, #tpu.memory_space<vmem>>, vector<4x4xbf16>
    %cst_25 = arith.constant dense<0.000000e+00> : vector<32x4xf32>
    %32 = tpu.matmul %30, %31, %cst_25 {dimension_numbers = #tpu.dot_dimension_numbers<[1], [0], [0], [1], [0, 0, 1, 1], [], []>} : vector<32x4xbf16>, vector<4x4xbf16>, vector<32x4xf32> -> vector<32x4xf32>
    %c0_26 = arith.constant 0 : index
    %c0_27 = arith.constant 0 : index
    %33 = vector.load %arg7[%c0_26, %c0_27] : memref<1x8xf32, #tpu.memory_space<vmem>>, vector<1x8xf32>
    %34 = vector.extract_strided_slice %33 {offsets = [0, 0], sizes = [1, 4], strides = [1, 1]} : vector<1x8xf32> to vector<1x4xf32>
    %35 = vector.broadcast %34 : vector<1x4xf32> to vector<32x4xf32>
    %36 = arith.addf %27, %35 : vector<32x4xf32>
    %37 = vector.extract_strided_slice %33 {offsets = [0, 4], sizes = [1, 4], strides = [1, 1]} : vector<1x8xf32> to vector<1x4xf32>
    %38 = vector.broadcast %37 : vector<1x4xf32> to vector<32x4xf32>
    %39 = arith.addf %32, %38 : vector<32x4xf32>
    %40 = tpu.concatenate %36, %39 in 1 : vector<32x4xf32>, vector<32x4xf32> -> vector<32x8xf32>
    %41 = arith.negf %40 : vector<32x8xf32>
    %42 = math.exp %41 : vector<32x8xf32>
    %cst_28 = arith.constant 1.000000e+00 : f32
    %43 = vector.broadcast %cst_28 : f32 to vector<32x8xf32>
    %44 = arith.addf %43, %42 : vector<32x8xf32>
    %45 = arith.divf %43, %44 : vector<32x8xf32>
    %46 = arith.mulf %40, %45 : vector<32x8xf32>
    %47 = vector.shape_cast %46 : vector<32x8xf32> to vector<1x4x8x8xf32>
    %48 = arith.truncf %47 : vector<1x4x8x8xf32> to vector<1x4x8x8xbf16>
    %c0_29 = arith.constant 0 : index
    %c0_30 = arith.constant 0 : index
    %c0_31 = arith.constant 0 : index
    %c0_32 = arith.constant 0 : index
    %49 = vector.load %arg8[%c0_29, %c0_30, %c0_31, %c0_32] : memref<1x4x8x8xbf16, #tpu.memory_space<vmem>>, vector<1x4x8x8xbf16>
    tpu.vector_store %arg8[%c0_29, %c0_30, %c0_31, %c0_32], %48 {strides = array<i32>} : memref<1x4x8x8xbf16, #tpu.memory_space<vmem>>, vector<1x4x8x8xbf16>,
    return
  }
  func.func @transform_0(%arg0: i32, %arg1: i32) -> (i32, i32, i32, i32) {
    %c0_i32 = arith.constant 0 : i32
    %c0_i32_0 = arith.constant 0 : i32
    %c0_i32_1 = arith.constant 0 : i32
    return %arg0, %arg1, %c0_i32, %c0_i32_0 : i32, i32, i32, i32
  }
  func.func @transform_1(%arg0: i32, %arg1: i32) -> (i32, i32, i32, i32) {
    %c1_i32 = arith.constant 1 : i32
    %0 = arith.addi %arg1, %c1_i32 : i32
    %c4_i32 = arith.constant 4 : i32
    %1 = arith.muli %0, %c4_i32 : i32
    %c0_i32 = arith.constant 0 : i32
    %c0_i32_0 = arith.constant 0 : i32
    %c0_i32_1 = arith.constant 0 : i32
    return %arg0, %1, %c0_i32, %c0_i32_0 : i32, i32, i32, i32
  }
  func.func @transform_2(%arg0: i32, %arg1: i32) -> (i32, i32, i32, i32) {
    %c0_i32 = arith.constant 0 : i32
    %c0_i32_0 = arith.constant 0 : i32
    %c0_i32_1 = arith.constant 0 : i32
    return %arg0, %arg1, %c0_i32, %c0_i32_0 : i32, i32, i32, i32
  }
  func.func @transform_3(%arg0: i32, %arg1: i32) -> (i32, i32, i32) {
    %c0_i32 = arith.constant 0 : i32
    %c0_i32_0 = arith.constant 0 : i32
    %c0_i32_1 = arith.constant 0 : i32
    %c0_i32_2 = arith.constant 0 : i32
    return %c0_i32, %c0_i32_0, %c0_i32_1 : i32, i32, i32
  }
  func.func @transform_4(%arg0: i32, %arg1: i32) -> (i32, i32) {
    %c0_i32 = arith.constant 0 : i32
    %c0_i32_0 = arith.constant 0 : i32
    %c0_i32_1 = arith.constant 0 : i32
    return %c0_i32, %c0_i32_0 : i32, i32
  }
  func.func @transform_5(%arg0: i32, %arg1: i32) -> (i32, i32) {
    %c0_i32 = arith.constant 0 : i32
    %c0_i32_0 = arith.constant 0 : i32
    %c0_i32_1 = arith.constant 0 : i32
    return %c0_i32, %c0_i32_0 : i32, i32
  }
  func.func @transform_6(%arg0: i32, %arg1: i32) -> (i32, i32, i32, i32) {
    %c0_i32 = arith.constant 0 : i32
    %c0_i32_0 = arith.constant 0 : i32
    %c0_i32_1 = arith.constant 0 : i32
    return %arg0, %arg1, %c0_i32, %c0_i32_0 : i32, i32, i32, i32
  }
}

</mosaic_0001>

<llo_original>
// kernel: adown_forward.1
$region0: #{adown_forward.1}
  #allocation0 [shape = 'u32[]', space=smem, size = 0x4, offset = 0x4, fixed_abs, tag = 'smem constant byte address 0x4 - core index']
  #allocation1 [shape = 'u32[144,128]{1,0:T(1,128)}', space=vmem, size = 0x12000, scoped, tag = 'internal scratch']
  %s0 = inlined_call_operand.vmem [shape: bf16[2,9,9,16], index: 0, kind: input, shape index: {}, may-alias: {0,1}]
  %s1 = inlined_call_operand.vmem [shape: bf16[2,9,9,16], index: 1, kind: input, shape index: {}, may-alias: {0,1}]
  %s2 = inlined_call_operand.vmem [shape: bf16[2,8,8,4], index: 2, kind: input, shape index: {}]
  %s3 = inlined_call_operand.vmem [shape: bf16[4,16,4], index: 3, kind: input, shape index: {}]
  %s4 = inlined_call_operand.vmem [shape: bf16[4,4], index: 4, kind: input, shape index: {}]
  %s5 = inlined_call_operand.vmem [shape: f32[1,8], index: 5, kind: input, shape index: {}]
  %s6 = inlined_call_operand.vmem [shape: bf16[2,8,8,8], index: 6, kind: output, shape index: {}]
  %s7 = sld [smem:[#allocation0]]
  $region57: #{adown_forward.1} parent=0
    _
  %s9 = ssub.s32 1, %s7
  %s10 = scalar_select 0, %s9, %s7
  loop: start=0, step=1, limit=6
  $region2: #{adown_forward.1} parent=0 // loop_pre_header
    _
  $region3: #{adown_forward.1} parent=0 // loop_header
    %s12 = sphi 0, %s16
    %p13 = scmp.ge.s32.totalorder %s12, 6
    %s19 = sphi 0, %s31
    %s20 = sphi 0, %s27
    %s21 = sphi 0, %s19
    %s22 = sphi 0, %s20
    %s23 = sphi 0, %s21
    %s24 = sphi 0, %s22
    %s36 = sphi 0, %s38
    %s39 = sphi 0, %s36
    %s40 = sphi 0, %s39
    %s56 = sphi 0, %s40
    %s68 = sphi 0, %s70
    %s71 = sphi 0, %s68
    %s72 = sphi 0, %s71
    %s88 = sphi 0, %s72
    %s96 = sphi 0, %s98
    %s99 = sphi 0, %s96
    %s100 = sphi 0, %s99
    %s116 = sphi 0, %s100
    %s120 = sphi 0, %s120
    %s122 = sphi 0, %s120
    %s123 = sphi 0, %s122
    %s137 = sphi 0, %s123
    %s141 = sphi 0, %s141
    %s143 = sphi 0, %s141
    %s144 = sphi 0, %s143
    %s158 = sphi 0, %s144
    %s162 = sphi 0, %s162
    %s164 = sphi 0, %s162
    %s165 = sphi 0, %s164
    %s179 = sphi 0, %s165
    %s187 = sphi 0, %s189
    %s190 = sphi 0, %s187
    %s191 = sphi 0, %s190
    %s207 = sphi 0, %s191
  $region4: #{adown_forward.1} parent=0 // loop_header_branch
    %15 = sbr.rel (%p13) target = $region8
  $region5: #{adown_forward.1} parent=0 // loop_body
    %s17 = ssub.s32 %s12, 1
    %s18 = ssub.s32 %s12, 2
    %s25 = sadd.s32 1, %s20
    %p26 = scmp.ge.s32.totalorder %s25, 2
    %s27 = scalar_select %p26, 0, %s25
    %s28 = sadd.s32 1, %s19
    %s29 = scalar_select %p26, %s28, %s19
    %p30 = scmp.ge.s32.totalorder %s29, 2
    %s31 = scalar_select %p30, 0, %s29
    %s32 = ssub.s32 %s19, %s31
    %s33 = ssub.s32 %s20, %s27
    %s34 = sor.u32 %s32, %s33
    %p35 = scmp.eq.s32.totalorder %s34, 0
    %s37 = sadd.s32 %s36, 1
    %s38 = scalar_select %p35, %s36, %s37
    %p41 = pneg %p35
    %p42 = scmp.eq.s32.totalorder %s12, 3
    %p43 = por %p41, %p42
    %p44 = scmp.ne.s32.totalorder %s36, %s39
    %p45 = scmp.eq.s32.totalorder %s12, 0
    %p46 = por %p44, %p45
    %p47 = scmp.ne.s32.totalorder %s36, %s39
    %p48 = scmp.eq.s32.totalorder %s17, 3
    %p49 = por %p47, %p48
    %p50 = scmp.ne.s32.totalorder %s39, %s40
    %p51 = scmp.eq.s32.totalorder %s17, 0
    %p52 = por %p50, %p51
    %p53 = scmp.ne.s32.totalorder %s39, %s40
    %p54 = scmp.eq.s32.totalorder %s18, 3
    %p55 = por %p53, %p54
    %p57 = scmp.ne.s32.totalorder %s40, %s56
    %p58 = scmp.eq.s32.totalorder %s18, 0
    %p59 = por %p57, %p58
    %s60 = sadd.s32 %s20, 1
    %s61 = smul.u32 %s60, 4
    %s62 = sadd.s32 %s27, 1
    %s63 = smul.u32 %s62, 4
    %s64 = ssub.s32 %s19, %s31
    %s65 = ssub.s32 %s61, %s63
    %s66 = sor.u32 %s64, %s65
    %p67 = scmp.eq.s32.totalorder %s66, 0
    %s69 = sadd.s32 %s68, 1
    %s70 = scalar_select %p67, %s68, %s69
    %p73 = pneg %p67
    %p74 = scmp.eq.s32.totalorder %s12, 3
    %p75 = por %p73, %p74
    %p76 = scmp.ne.s32.totalorder %s68, %s71
    %p77 = scmp.eq.s32.totalorder %s12, 0
    %p78 = por %p76, %p77
    %p79 = scmp.ne.s32.totalorder %s68, %s71
    %p80 = scmp.eq.s32.totalorder %s17, 3
    %p81 = por %p79, %p80
    %p82 = scmp.ne.s32.totalorder %s71, %s72
    %p83 = scmp.eq.s32.totalorder %s17, 0
    %p84 = por %p82, %p83
    %p85 = scmp.ne.s32.totalorder %s71, %s72
    %p86 = scmp.eq.s32.totalorder %s18, 3
    %p87 = por %p85, %p86
    %p89 = scmp.ne.s32.totalorder %s72, %s88
    %p90 = scmp.eq.s32.totalorder %s18, 0
    %p91 = por %p89, %p90
    %s92 = ssub.s32 %s19, %s31
    %s93 = ssub.s32 %s20, %s27
    %s94 = sor.u32 %s92, %s93
    %p95 = scmp.eq.s32.totalorder %s94, 0
    %s97 = sadd.s32 %s96, 1
    %s98 = scalar_select %p95, %s96, %s97
    %p101 = pneg %p95
    %p102 = scmp.eq.s32.totalorder %s12, 3
    %p103 = por %p101, %p102
    %p104 = scmp.ne.s32.totalorder %s96, %s99
    %p105 = scmp.eq.s32.totalorder %s12, 0
    %p106 = por %p104, %p105
    %p107 = scmp.ne.s32.totalorder %s96, %s99
    %p108 = scmp.eq.s32.totalorder %s17, 3
    %p109 = por %p107, %p108
    %p110 = scmp.ne.s32.totalorder %s99, %s100
    %p111 = scmp.eq.s32.totalorder %s17, 0
    %p112 = por %p110, %p111
    %p113 = scmp.ne.s32.totalorder %s99, %s100
    %p114 = scmp.eq.s32.totalorder %s18, 3
    %p115 = por %p113, %p114
    %p117 = scmp.ne.s32.totalorder %s100, %s116
    %p118 = scmp.eq.s32.totalorder %s18, 0
    %p119 = por %p117, %p118
    %s121 = sadd.s32 %s120, 1
    %p124 = scmp.eq.s32.totalorder %s12, 3
    %p125 = scmp.ne.s32.totalorder %s120, %s122
    %p126 = scmp.eq.s32.totalorder %s12, 0
    %p127 = por %p125, %p126
    %p128 = scmp.ne.s32.totalorder %s120, %s122
    %p129 = scmp.eq.s32.totalorder %s17, 3
    %p130 = por %p128, %p129
    %p131 = scmp.ne.s32.totalorder %s122, %s123
    %p132 = scmp.eq.s32.totalorder %s17, 0
    %p133 = por %p131, %p132
    %p134 = scmp.ne.s32.totalorder %s122, %s123
    %p135 = scmp.eq.s32.totalorder %s18, 3
    %p136 = por %p134, %p135
    %p138 = scmp.ne.s32.totalorder %s123, %s137
    %p139 = scmp.eq.s32.totalorder %s18, 0
    %p140 = por %p138, %p139
    %s142 = sadd.s32 %s141, 1
    %p145 = scmp.eq.s32.totalorder %s12, 3
    %p146 = scmp.ne.s32.totalorder %s141, %s143
    %p147 = scmp.eq.s32.totalorder %s12, 0
    %p148 = por %p146, %p147
    %p149 = scmp.ne.s32.totalorder %s141, %s143
    %p150 = scmp.eq.s32.totalorder %s17, 3
    %p151 = por %p149, %p150
    %p152 = scmp.ne.s32.totalorder %s143, %s144
    %p153 = scmp.eq.s32.totalorder %s17, 0
    %p154 = por %p152, %p153
    %p155 = scmp.ne.s32.totalorder %s143, %s144
    %p156 = scmp.eq.s32.totalorder %s18, 3
    %p157 = por %p155, %p156
    %p159 = scmp.ne.s32.totalorder %s144, %s158
    %p160 = scmp.eq.s32.totalorder %s18, 0
    %p161 = por %p159, %p160
    %s163 = sadd.s32 %s162, 1
    %p166 = scmp.eq.s32.totalorder %s12, 3
    %p167 = scmp.ne.s32.totalorder %s162, %s164
    %p168 = scmp.eq.s32.totalorder %s12, 0
    %p169 = por %p167, %p168
    %p170 = scmp.ne.s32.totalorder %s162, %s164
    %p171 = scmp.eq.s32.totalorder %s17, 3
    %p172 = por %p170, %p171
    %p173 = scmp.ne.s32.totalorder %s164, %s165
    %p174 = scmp.eq.s32.totalorder %s17, 0
    %p175 = por %p173, %p174
    %p176 = scmp.ne.s32.totalorder %s164, %s165
    %p177 = scmp.eq.s32.totalorder %s18, 3
    %p178 = por %p176, %p177
    %p180 = scmp.ne.s32.totalorder %s165, %s179
    %p181 = scmp.eq.s32.totalorder %s18, 0
    %p182 = por %p180, %p181
    %s183 = ssub.s32 %s19, %s31
    %s184 = ssub.s32 %s20, %s27
    %s185 = sor.u32 %s183, %s184
    %p186 = scmp.eq.s32.totalorder %s185, 0
    %s188 = sadd.s32 %s187, 1
    %s189 = scalar_select %p186, %s187, %s188
    %p192 = pneg %p186
    %p193 = scmp.eq.s32.totalorder %s12, 3
    %p194 = por %p192, %p193
    %p195 = scmp.ne.s32.totalorder %s187, %s190
    %p196 = scmp.eq.s32.totalorder %s12, 0
    %p197 = por %p195, %p196
    %p198 = scmp.ne.s32.totalorder %s187, %s190
    %p199 = scmp.eq.s32.totalorder %s17, 3
    %p200 = por %p198, %p199
    %p201 = scmp.ne.s32.totalorder %s190, %s191
    %p202 = scmp.eq.s32.totalorder %s17, 0
    %p203 = por %p201, %p202
    %p204 = scmp.ne.s32.totalorder %s190, %s191
    %p205 = scmp.eq.s32.totalorder %s18, 3
    %p206 = por %p204, %p205
    %p208 = scmp.ne.s32.totalorder %s191, %s207
    %p209 = scmp.eq.s32.totalorder %s18, 0
    %p210 = por %p208, %p209
    %p211 = scmp.le.s32.totalorder 1, %s12
    %p212 = scmp.lt.s32.totalorder %s12, 5
    %p213 = pnand %p211, %p212
    %p214 = pneg %p213
    // Predicated region
    $region9: #{adown_forward.1} parent=5 // pred_check
      _
    $region10: #{adown_forward.1} parent=5 // pred_check_branch
      %216 = sbr.rel (%p213) target = $region12
    $region11: #{adown_forward.1} parent=5 // pred_region
      %s217 = ssub.s32 %s12, 1
      // Predicated region
      $region13: #{adown_forward.1} parent=11 // pred_check
        %p218 = pneg %p133
      $region14: #{adown_forward.1} parent=11 // pred_check_branch
        %220 = sbr.rel (%p218) target = $region16
      $region15: #{adown_forward.1} parent=11 // pred_region
        _
      $region16: #{adown_forward.1} parent=11 // pred_fallthru
        _
      // Predicated region
      $region17: #{adown_forward.1} parent=11 // pred_check
        %p221 = pneg %p154
      $region18: #{adown_forward.1} parent=11 // pred_check_branch
        %223 = sbr.rel (%p221) target = $region20
      $region19: #{adown_forward.1} parent=11 // pred_region
        _
      $region20: #{adown_forward.1} parent=11 // pred_fallthru
        _
      // Predicated region
      $region21: #{adown_forward.1} parent=11 // pred_check
        %p224 = pneg %p175
      $region22: #{adown_forward.1} parent=11 // pred_check_branch
        %226 = sbr.rel (%p224) target = $region24
      $region23: #{adown_forward.1} parent=11 // pred_region
        _
      $region24: #{adown_forward.1} parent=11 // pred_fallthru
        _
    $region12: #{adown_forward.1} parent=5 // pred_fallthru
      _
    %p227 = scmp.lt.s32.totalorder %s12, 4
    // Predicated region
    $region25: #{adown_forward.1} parent=5 // pred_check
      %p228 = pneg %p227
    $region26: #{adown_forward.1} parent=5 // pred_check_branch
      %230 = sbr.rel (%p228) target = $region28
    $region27: #{adown_forward.1} parent=5 // pred_region
      // Predicated region
      $region29: #{adown_forward.1} parent=27 // pred_check
        %p231 = pneg %p46
      $region30: #{adown_forward.1} parent=27 // pred_check_branch
        %233 = sbr.rel (%p231) target = $region32
      $region31: #{adown_forward.1} parent=27 // pred_region
        %s234 = smul.u32 4, %s20
        %s235 = ssub.s32 9, %s234
        %p236 = scmp.lt.s32.totalorder %s235, 4
        %s237 = scalar_select %p236, %s235, 4
        %s238 = smul.u32 64, %s237
        %s239 = smul.u32 %s238, 2
        %p240 = scmp.lt.s32.totalorder %s19, 1
        %s241 = scalar_select %p240, %s19, 1
        %p242 = scmp.lt.s32.totalorder %s234, 8
        %s243 = scalar_select %p242, %s234, 8
        %s244 = smul.addr %s243, 2
        %s245 = smul.addr %s241, 18
        %s246 = sadd.s32 %s244, %s245
        %s247 = smul.addr %s246, 4
        %s248 = scalar_lea.vmem %s0, %s247
        %s249 = smul.u32 4, %s20
        %s250 = ssub.s32 9, %s249
        %p251 = scmp.lt.s32.totalorder %s250, 4
        %s252 = scalar_select %p251, %s250, 4
        %s253 = smul.u32 64, %s252
        %s254 = smul.u32 %s253, 2
      $region32: #{adown_forward.1} parent=27 // pred_fallthru
        _
      // Predicated region
      $region33: #{adown_forward.1} parent=27 // pred_check
        %p255 = pneg %p78
      $region34: #{adown_forward.1} parent=27 // pred_check_branch
        %257 = sbr.rel (%p255) target = $region36
      $region35: #{adown_forward.1} parent=27 // pred_region
        %s258 = sadd.s32 %s20, 1
        %s259 = smul.u32 %s258, 4
        %p260 = scmp.lt.s32.totalorder %s19, 1
        %s261 = scalar_select %p260, %s19, 1
        %p262 = scmp.lt.s32.totalorder %s259, 8
        %s263 = scalar_select %p262, %s259, 8
        %s264 = smul.addr %s263, 2
        %s265 = smul.addr %s261, 18
        %s266 = sadd.s32 %s264, %s265
        %s267 = smul.addr %s266, 4
        %s268 = scalar_lea.vmem %s1, %s267
        %s269 = sadd.s32 %s20, 1
        %s270 = smul.u32 %s269, 4
      $region36: #{adown_forward.1} parent=27 // pred_fallthru
        _
      // Predicated region
      $region37: #{adown_forward.1} parent=27 // pred_check
        %p271 = pneg %p106
      $region38: #{adown_forward.1} parent=27 // pred_check_branch
        %273 = sbr.rel (%p271) target = $region40
      $region39: #{adown_forward.1} parent=27 // pred_region
        %s274 = smul.u32 4, %s20
        %p275 = scmp.lt.s32.totalorder %s19, 1
        %s276 = scalar_select %p275, %s19, 1
        %p277 = scmp.lt.s32.totalorder %s274, 7
        %s278 = scalar_select %p277, %s274, 7
        %s279 = smul.addr %s276, 8
        %s280 = sadd.s32 %s278, %s279
        %s281 = smul.addr %s280, 4
        %s282 = scalar_lea.vmem %s2, %s281
        %s283 = smul.u32 4, %s20
      $region40: #{adown_forward.1} parent=27 // pred_fallthru
        _
    $region28: #{adown_forward.1} parent=5 // pred_fallthru
      _
    %p284 = scmp.le.s32.totalorder 1, %s12
    %p285 = scmp.lt.s32.totalorder %s12, 5
    %p286 = pnand %p284, %p285
    %p287 = pneg %p286
    // Predicated region
    $region41: #{adown_forward.1} parent=5 // pred_check
      _
    $region42: #{adown_forward.1} parent=5 // pred_check_branch
      %289 = sbr.rel (%p286) target = $region44
    $region43: #{adown_forward.1} parent=5 // pred_region
      %s290 = ssub.s32 %s12, 1
      %s291 = smul.u32 4, %s22
      %s292 = ssub.s32 9, %s291
      %p293 = scmp.lt.s32.totalorder %s292, 4
      %s294 = scalar_select %p293, %s292, 4
      %s295 = smul.u32 64, %s294
      %s296 = smul.u32 %s295, 2
      %p297 = scmp.lt.s32.totalorder %s21, 1
      %s298 = scalar_select %p297, %s21, 1
      %p299 = scmp.lt.s32.totalorder %s291, 8
      %s300 = scalar_select %p299, %s291, 8
      %s301 = smul.addr %s300, 2
      %s302 = smul.addr %s298, 18
      %s303 = sadd.s32 %s301, %s302
      %s304 = smul.addr %s303, 4
      %s305 = scalar_lea.vmem %s0, %s304
      %p306 = pneg %p52
      %p307 = pneg %p49
      %s308 = sadd.s32 %s22, 1
      %s309 = smul.u32 %s308, 4
      %p310 = scmp.lt.s32.totalorder %s21, 1
      %s311 = scalar_select %p310, %s21, 1
      %p312 = scmp.lt.s32.totalorder %s309, 8
      %s313 = scalar_select %p312, %s309, 8
      %s314 = smul.addr %s313, 2
      %s315 = smul.addr %s311, 18
      %s316 = sadd.s32 %s314, %s315
      %s317 = smul.addr %s316, 4
      %s318 = scalar_lea.vmem %s1, %s317
      %p319 = pneg %p84
      %p320 = pneg %p81
      %s321 = smul.u32 4, %s22
      %p322 = scmp.lt.s32.totalorder %s21, 1
      %s323 = scalar_select %p322, %s21, 1
      %p324 = scmp.lt.s32.totalorder %s321, 7
      %s325 = scalar_select %p324, %s321, 7
      %s326 = smul.addr %s323, 8
      %s327 = sadd.s32 %s325, %s326
      %s328 = smul.addr %s327, 4
      %s329 = scalar_lea.vmem %s2, %s328
      %p330 = pneg %p112
      %p331 = pneg %p109
      %p332 = pneg %p133
      %p333 = pneg %p130
      %p334 = pneg %p154
      %p335 = pneg %p151
      %p336 = pneg %p175
      %p337 = pneg %p172
      %p338 = pneg %p203
      %p339 = pneg %p200
      %s340 = smul.u32 4, %s22
      %p341 = scmp.lt.s32.totalorder %s21, 1
      %s342 = scalar_select %p341, %s21, 1
      %p343 = scmp.lt.s32.totalorder %s340, 7
      %s344 = scalar_select %p343, %s340, 7
      %s345 = smul.addr %s342, 8
      %s346 = sadd.s32 %s344, %s345
      %s347 = smul.addr %s346, 4
      %s348 = scalar_lea.vmem %s6, %s347
      %s349 = smul.u32 4, %s22
      %s350 = ssub.s32 9, %s349
      %p351 = scmp.lt.s32.totalorder %s350, 4
      %s352 = scalar_select %p351, %s350, 4
      %s353 = smul.u32 64, %s352
      %s354 = smul.u32 %s353, 2
      %p355 = scmp.lt.s32.totalorder %s21, 1
      %s356 = scalar_select %p355, %s21, 1
      %p357 = scmp.lt.s32.totalorder %s349, 8
      %s358 = scalar_select %p357, %s349, 8
      %s359 = smul.addr %s358, 2
      %s360 = smul.addr %s356, 18
      %s361 = sadd.s32 %s359, %s360
      %s362 = smul.addr %s361, 4
      %s363 = scalar_lea.vmem %s0, %s362
      %s364 = smul.u32 4, %s22
      %s365 = ssub.s32 9, %s364
      %p366 = scmp.lt.s32.totalorder %s365, 4
      %s367 = scalar_select %p366, %s365, 4
      %s368 = smul.u32 64, %s367
      %s369 = smul.u32 %s368, 2
      %s370 = sadd.s32 %s22, 1
      %s371 = smul.u32 %s370, 4
      %p372 = scmp.lt.s32.totalorder %s21, 1
      %s373 = scalar_select %p372, %s21, 1
      %p374 = scmp.lt.s32.totalorder %s371, 8
      %s375 = scalar_select %p374, %s371, 8
      %s376 = smul.addr %s375, 2
      %s377 = smul.addr %s373, 18
      %s378 = sadd.s32 %s376, %s377
      %s379 = smul.addr %s378, 4
      %s380 = scalar_lea.vmem %s1, %s379
      %s381 = sadd.s32 %s22, 1
      %s382 = smul.u32 %s381, 4
      %s383 = smul.u32 4, %s22
      %p384 = scmp.lt.s32.totalorder %s21, 1
      %s385 = scalar_select %p384, %s21, 1
      %p386 = scmp.lt.s32.totalorder %s383, 7
      %s387 = scalar_select %p386, %s383, 7
      %s388 = smul.addr %s385, 8
      %s389 = sadd.s32 %s387, %s388
      %s390 = smul.addr %s389, 4
      %s391 = scalar_lea.vmem %s2, %s390
      %s392 = smul.u32 4, %s22
      %s393 = smul.u32 4, %s22
      %p394 = scmp.lt.s32.totalorder %s21, 1
      %s395 = scalar_select %p394, %s21, 1
      %p396 = scmp.lt.s32.totalorder %s393, 7
      %s397 = scalar_select %p396, %s393, 7
      %s398 = smul.addr %s395, 8
      %s399 = sadd.s32 %s397, %s398
      %s400 = smul.addr %s399, 4
      %s401 = scalar_lea.vmem %s6, %s400
      %s402 = smul.u32 4, %s22
      %v404 = vld [vmem:[%s363] sm:$0xf]
      %v405 = vld [vmem:[%s363 + $0x4] sm:$0x1]
      %v406 = vld [vmem:[%s363 + $0x8] sm:$0xf]
      %v407 = vld [vmem:[%s363 + $0xc] sm:$0x1]
      %v408 = vld [vmem:[%s363 + $0x10] sm:$0xf]
      %v409 = vld [vmem:[%s363 + $0x14] sm:$0x1]
      %v410 = vld [vmem:[%s363 + $0x18] sm:$0xf]
      %v411 = vld [vmem:[%s363 + $0x1c] sm:$0x1]
      %v412 = vld [vmem:[%s380] sm:$0xf]
      %v413 = vld [vmem:[%s380 + $0x4] sm:$0x1]
      %v414 = vld [vmem:[%s3] sm:$0xf]
      %v415 = vld [vmem:[%s3 + $0x4] sm:$0xf]
      %vm416 = vsmask.f32 3328
      %vm417 = vsmask.f32 7440
      %vm418 = vmor %vm416, %vm417
      %v420 = vshrl.u32 %v404, 16
      %v422 = vrot.slane %v420, 4
      %v423 = vshll.u32 %v404, 16
      %v425 = vrot.slane %v423, 5
      %v426 = vor.u32 %v422, %v425
      %v427 = vrot.slane %v426, 4
      %v429 = vshll.u32 %v405, 16
      %v431 = vrot.slane %v429, 5
      %v432 = vsel %vm418, %v427, %v431
      %v434 = vshrl.u32 %v406, 16
      %v436 = vrot.slane %v434, 4
      %v437 = vshll.u32 %v406, 16
      %v439 = vrot.slane %v437, 5
      %v440 = vor.u32 %v436, %v439
      %v441 = vrot.slane %v440, 4
      %v443 = vshll.u32 %v407, 16
      %v445 = vrot.slane %v443, 5
      %v446 = vsel %vm418, %v441, %v445
      %v448 = vshrl.u32 %v408, 16
      %v450 = vrot.slane %v448, 4
      %v451 = vshll.u32 %v408, 16
      %v453 = vrot.slane %v451, 5
      %v454 = vor.u32 %v450, %v453
      %v455 = vrot.slane %v454, 4
      %v457 = vshll.u32 %v409, 16
      %v459 = vrot.slane %v457, 5
      %v460 = vsel %vm418, %v455, %v459
      %v462 = vshrl.u32 %v410, 16
      %v464 = vrot.slane %v462, 4
      %v465 = vshll.u32 %v410, 16
      %v467 = vrot.slane %v465, 5
      %v468 = vor.u32 %v464, %v467
      %v469 = vrot.slane %v468, 4
      %v471 = vshll.u32 %v411, 16
      %v473 = vrot.slane %v471, 5
      %v474 = vsel %vm418, %v469, %v473
      %s475 = scalar_lea.vmem %s3, 8
      %v476 = vld [vmem:[%s475] sm:$0xf]
      %v477 = vld [vmem:[%s475 + $0x4] sm:$0xf]
      %v478 = vunpack.c.l.b16 %v432
      %v479 = vunpack.c.l.b16 %v446
      %v480 = vunpack.c.l.b16 %v460
      %v481 = vunpack.c.l.b16 %v474
      %v482 = vpack.c.b16 %v479, %v478
      %v483 = vpack.c.b16 %v481, %v480
      %v486 = vunpack.c.l.b16 %v476
      %v487 = vunpack.c.l.b16 %v477
      %v488 = vpack.c.b16 %v487, %v486
      %vm490 = vcmask 130048
      %v492 = vsel %vm490, %v482, 0
      %v495 = vsel %vm490, %v483, 0
      %497 = vmatprep.subr.bf16.mxu0 0
      %498 = vmatpush1.bf16.msra.mxu0 %v488
      %499 = vmatprep.subr.bf16.mxu0 0
      %500 = vmatpush1.bf16.msra.mxu0 0
      %501 = vmatprep.subr.bf16.mxu0 0
      %502 = vmatpush1.bf16.msra.mxu0 0
      %503 = vmatprep.subr.bf16.mxu0 0
      %504 = vmatpush1.bf16.msra.mxu0 0
      %505 = vmatprep.subr.bf16.mxu0 0
      %506 = vmatpush1.bf16.msra.mxu0 0
      %507 = vmatprep.subr.bf16.mxu0 0
      %508 = vmatpush1.bf16.msra.mxu0 0
      %509 = vmatprep.subr.bf16.mxu0 0
      %510 = vmatpush1.bf16.msra.mxu0 0
      %511 = vmatprep.subr.bf16.mxu0 0
      %512 = vmatpush1.bf16.msra.mxu0 0
      %513 = vmatprep.subr.bf16.mxu0 0
      %514 = vmatpush1.bf16.msra.mxu0 0
      %515 = vmatprep.subr.bf16.mxu0 0
      %516 = vmatpush1.bf16.msra.mxu0 0
      %517 = vmatprep.subr.bf16.mxu0 0
      %518 = vmatpush1.bf16.msra.mxu0 0
      %519 = vmatprep.subr.bf16.mxu0 0
      %520 = vmatpush1.bf16.msra.mxu0 0
      %521 = vmatprep.subr.bf16.mxu0 0
      %522 = vmatpush1.bf16.msra.mxu0 0
      %523 = vmatprep.subr.bf16.mxu0 0
      %524 = vmatpush1.bf16.msra.mxu0 0
      %525 = vmatprep.subr.bf16.mxu0 0
      %526 = vmatpush1.bf16.msra.mxu0 0
      %527 = vmatprep.subr.bf16.mxu0 0
      %528 = vmatpush1.bf16.msra.mxu0 0
      %529 = vmatprep.mubr.bf16.mxu0 0
      %530 = vmatmul.mubr.bf16.gmra.mrb[0].mxu0 %v492
      %v531 = vpop.f32.mrb[0].mxu0
      %v532 = vadd.f32 0.0, %v531
      %v533 = vpop.f32.mrb[0].mxu0
      %v534 = vpop.f32.mrb[0].mxu0
      %v535 = vadd.f32 0.0, %v534
      %v536 = vpop.f32.mrb[0].mxu0
      %537 = vmatprep.mubr.bf16.mxu0 0
      %538 = vmatmul.mubr.bf16.gmra.mrb[0].mxu0 %v495
      %v539 = vpop.f32.mrb[0].mxu0
      %v540 = vadd.f32 0.0, %v539
      %v541 = vpop.f32.mrb[0].mxu0
      %v542 = vpop.f32.mrb[0].mxu0
      %v543 = vadd.f32 0.0, %v542
      %v544 = vpop.f32.mrb[0].mxu0
      %545 = vdwg.mxu0
      %v550 = vunpack.c.l.b16 %v404
      %v551 = vunpack.c.l.b16 %v406
      %v552 = vunpack.c.l.b16 %v408
      %v553 = vunpack.c.l.b16 %v410
      %v554 = vpack.c.b16 %v551, %v550
      %v555 = vpack.c.b16 %v553, %v552
      %v558 = vunpack.c.l.b16 %v414
      %v559 = vunpack.c.l.b16 %v415
      %v560 = vpack.c.b16 %v559, %v558
      %v563 = vsel %vm490, %v554, 0
      %v566 = vsel %vm490, %v555, 0
      %568 = vmatprep.subr.bf16.mxu0 0
      %569 = vmatpush1.bf16.msra.mxu0 %v560
      %570 = vmatprep.subr.bf16.mxu0 0
      %571 = vmatpush1.bf16.msra.mxu0 0
      %572 = vmatprep.subr.bf16.mxu0 0
      %573 = vmatpush1.bf16.msra.mxu0 0
      %574 = vmatprep.subr.bf16.mxu0 0
      %575 = vmatpush1.bf16.msra.mxu0 0
      %576 = vmatprep.subr.bf16.mxu0 0
      %577 = vmatpush1.bf16.msra.mxu0 0
      %578 = vmatprep.subr.bf16.mxu0 0
      %579 = vmatpush1.bf16.msra.mxu0 0
      %580 = vmatprep.subr.bf16.mxu0 0
      %581 = vmatpush1.bf16.msra.mxu0 0
      %582 = vmatprep.subr.bf16.mxu0 0
      %583 = vmatpush1.bf16.msra.mxu0 0
      %584 = vmatprep.subr.bf16.mxu0 0
      %585 = vmatpush1.bf16.msra.mxu0 0
      %586 = vmatprep.subr.bf16.mxu0 0
      %587 = vmatpush1.bf16.msra.mxu0 0
      %588 = vmatprep.subr.bf16.mxu0 0
      %589 = vmatpush1.bf16.msra.mxu0 0
      %590 = vmatprep.subr.bf16.mxu0 0
      %591 = vmatpush1.bf16.msra.mxu0 0
      %592 = vmatprep.subr.bf16.mxu0 0
      %593 = vmatpush1.bf16.msra.mxu0 0
      %594 = vmatprep.subr.bf16.mxu0 0
      %595 = vmatpush1.bf16.msra.mxu0 0
      %596 = vmatprep.subr.bf16.mxu0 0
      %597 = vmatpush1.bf16.msra.mxu0 0
      %598 = vmatprep.subr.bf16.mxu0 0
      %599 = vmatpush1.bf16.msra.mxu0 0
      %600 = vmatprep.mubr.bf16.mxu0 0
      %601 = vmatmul.mubr.bf16.gmra.mrb[0].mxu0 %v563
      %v602 = vpop.f32.mrb[0].mxu0
      %v603 = vadd.f32 %v532, %v602
      %v604 = vpop.f32.mrb[0].mxu0
      %v605 = vpop.f32.mrb[0].mxu0
      %v606 = vadd.f32 %v535, %v605
      %v607 = vpop.f32.mrb[0].mxu0
      %608 = vmatprep.mubr.bf16.mxu0 0
      %609 = vmatmul.mubr.bf16.gmra.mrb[0].mxu0 %v566
      %v610 = vpop.f32.mrb[0].mxu0
      %v611 = vadd.f32 %v540, %v610
      %v612 = vpop.f32.mrb[0].mxu0
      %v613 = vpop.f32.mrb[0].mxu0
      %v614 = vadd.f32 %v543, %v613
      %v615 = vpop.f32.mrb[0].mxu0
      %616 = vdwg.mxu0
      %s617 = scalar_lea.vmem %s3, 16
      %v618 = vld [vmem:[%s617] sm:$0xf]
      %v619 = vld [vmem:[%s617 + $0x4] sm:$0xf]
      %v621 = vunpack.c.l.b16 %v412
      %v622 = vpack.c.b16 %v552, %v551
      %v623 = vpack.c.b16 %v621, %v553
      %v626 = vunpack.c.l.b16 %v618
      %v627 = vunpack.c.l.b16 %v619
      %v628 = vpack.c.b16 %v627, %v626
      %v631 = vsel %vm490, %v622, 0
      %v634 = vsel %vm490, %v623, 0
      %636 = vmatprep.subr.bf16.mxu0 0
      %637 = vmatpush1.bf16.msra.mxu0 %v628
      %638 = vmatprep.subr.bf16.mxu0 0
      %639 = vmatpush1.bf16.msra.mxu0 0
      %640 = vmatprep.subr.bf16.mxu0 0
      %641 = vmatpush1.bf16.msra.mxu0 0
      %642 = vmatprep.subr.bf16.mxu0 0
      %643 = vmatpush1.bf16.msra.mxu0 0
      %644 = vmatprep.subr.bf16.mxu0 0
      %645 = vmatpush1.bf16.msra.mxu0 0
      %646 = vmatprep.subr.bf16.mxu0 0
      %647 = vmatpush1.bf16.msra.mxu0 0
      %648 = vmatprep.subr.bf16.mxu0 0
      %649 = vmatpush1.bf16.msra.mxu0 0
      %650 = vmatprep.subr.bf16.mxu0 0
      %651 = vmatpush1.bf16.msra.mxu0 0
      %652 = vmatprep.subr.bf16.mxu0 0
      %653 = vmatpush1.bf16.msra.mxu0 0
      %654 = vmatprep.subr.bf16.mxu0 0
      %655 = vmatpush1.bf16.msra.mxu0 0
      %656 = vmatprep.subr.bf16.mxu0 0
      %657 = vmatpush1.bf16.msra.mxu0 0
      %658 = vmatprep.subr.bf16.mxu0 0
      %659 = vmatpush1.bf16.msra.mxu0 0
      %660 = vmatprep.subr.bf16.mxu0 0
      %661 = vmatpush1.bf16.msra.mxu0 0
      %662 = vmatprep.subr.bf16.mxu0 0
      %663 = vmatpush1.bf16.msra.mxu0 0
      %664 = vmatprep.subr.bf16.mxu0 0
      %665 = vmatpush1.bf16.msra.mxu0 0
      %666 = vmatprep.subr.bf16.mxu0 0
      %667 = vmatpush1.bf16.msra.mxu0 0
      %668 = vmatprep.mubr.bf16.mxu0 0
      %669 = vmatmul.mubr.bf16.gmra.mrb[0].mxu0 %v631
      %v670 = vpop.f32.mrb[0].mxu0
      %v671 = vadd.f32 0.0, %v670
      %v672 = vpop.f32.mrb[0].mxu0
      %v673 = vpop.f32.mrb[0].mxu0
      %v674 = vadd.f32 0.0, %v673
      %v675 = vpop.f32.mrb[0].mxu0
      %676 = vmatprep.mubr.bf16.mxu0 0
      %677 = vmatmul.mubr.bf16.gmra.mrb[0].mxu0 %v634
      %v678 = vpop.f32.mrb[0].mxu0
      %v679 = vadd.f32 0.0, %v678
      %v680 = vpop.f32.mrb[0].mxu0
      %v681 = vpop.f32.mrb[0].mxu0
      %v682 = vadd.f32 0.0, %v681
      %v683 = vpop.f32.mrb[0].mxu0
      %684 = vdwg.mxu0
      %v685 = vadd.f32 %v603, %v671
      %v686 = vadd.f32 %v606, %v674
      %v687 = vadd.f32 %v611, %v679
      %v688 = vadd.f32 %v614, %v682
      %v690 = vshrl.u32 %v412, 16
      %v692 = vrot.slane %v690, 4
      %v693 = vshll.u32 %v412, 16
      %v695 = vrot.slane %v693, 5
      %v696 = vor.u32 %v692, %v695
      %v697 = vrot.slane %v696, 4
      %v699 = vshll.u32 %v413, 16
      %v701 = vrot.slane %v699, 5
      %v702 = vsel %vm418, %v697, %v701
      %s703 = scalar_lea.vmem %s3, 24
      %v704 = vld [vmem:[%s703] sm:$0xf]
      %v705 = vld [vmem:[%s703 + $0x4] sm:$0xf]
      %v706 = vunpack.c.l.b16 %v702
      %v707 = vpack.c.b16 %v480, %v479
      %v708 = vpack.c.b16 %v706, %v481
      %v711 = vunpack.c.l.b16 %v704
      %v712 = vunpack.c.l.b16 %v705
      %v713 = vpack.c.b16 %v712, %v711
      %v716 = vsel %vm490, %v707, 0
      %v719 = vsel %vm490, %v708, 0
      %721 = vmatprep.subr.bf16.mxu0 0
      %722 = vmatpush1.bf16.msra.mxu0 %v713
      %723 = vmatprep.subr.bf16.mxu0 0
      %724 = vmatpush1.bf16.msra.mxu0 0
      %725 = vmatprep.subr.bf16.mxu0 0
      %726 = vmatpush1.bf16.msra.mxu0 0
      %727 = vmatprep.subr.bf16.mxu0 0
      %728 = vmatpush1.bf16.msra.mxu0 0
      %729 = vmatprep.subr.bf16.mxu0 0
      %730 = vmatpush1.bf16.msra.mxu0 0
      %731 = vmatprep.subr.bf16.mxu0 0
      %732 = vmatpush1.bf16.msra.mxu0 0
      %733 = vmatprep.subr.bf16.mxu0 0
      %734 = vmatpush1.bf16.msra.mxu0 0
      %735 = vmatprep.subr.bf16.mxu0 0
      %736 = vmatpush1.bf16.msra.mxu0 0
      %737 = vmatprep.subr.bf16.mxu0 0
      %738 = vmatpush1.bf16.msra.mxu0 0
      %739 = vmatprep.subr.bf16.mxu0 0
      %740 = vmatpush1.bf16.msra.mxu0 0
      %741 = vmatprep.subr.bf16.mxu0 0
      %742 = vmatpush1.bf16.msra.mxu0 0
      %743 = vmatprep.subr.bf16.mxu0 0
      %744 = vmatpush1.bf16.msra.mxu0 0
      %745 = vmatprep.subr.bf16.mxu0 0
      %746 = vmatpush1.bf16.msra.mxu0 0
      %747 = vmatprep.subr.bf16.mxu0 0
      %748 = vmatpush1.bf16.msra.mxu0 0
      %749 = vmatprep.subr.bf16.mxu0 0
      %750 = vmatpush1.bf16.msra.mxu0 0
      %751 = vmatprep.subr.bf16.mxu0 0
      %752 = vmatpush1.bf16.msra.mxu0 0
      %753 = vmatprep.mubr.bf16.mxu0 0
      %754 = vmatmul.mubr.bf16.gmra.mrb[0].mxu0 %v716
      %v755 = vpop.f32.mrb[0].mxu0
      %v756 = vadd.f32 0.0, %v755
      %v757 = vpop.f32.mrb[0].mxu0
      %v758 = vpop.f32.mrb[0].mxu0
      %v759 = vadd.f32 0.0, %v758
      %v760 = vpop.f32.mrb[0].mxu0
      %761 = vmatprep.mubr.bf16.mxu0 0
      %762 = vmatmul.mubr.bf16.gmra.mrb[0].mxu0 %v719
      %v763 = vpop.f32.mrb[0].mxu0
      %v764 = vadd.f32 0.0, %v763
      %v765 = vpop.f32.mrb[0].mxu0
      %v766 = vpop.f32.mrb[0].mxu0
      %v767 = vadd.f32 0.0, %v766
      %v768 = vpop.f32.mrb[0].mxu0
      %769 = vdwg.mxu0
      %v770 = vadd.f32 %v685, %v756
      %v771 = vadd.f32 %v686, %v759
      %v772 = vadd.f32 %v687, %v764
      %v773 = vadd.f32 %v688, %v767
      %v774 = vld [vmem:[%s391] sm:$0xf]
      %v775 = vld [vmem:[%s391 + $0x4] sm:$0xf]
      %v776 = vld [vmem:[%s391 + $0x8] sm:$0xf]
      %v777 = vld [vmem:[%s391 + $0xc] sm:$0xf]
      %v778 = vld [vmem:[%s4] sm:$0x3]
      %v779 = vld [vmem:[%s5] sm:$0x1]
      %v781 = vlaneseq
      %v782 = vshrl.u32 %v781, 7
      %v783 = vsub.s32 0, %v782
      %v784 = vrot.slane %v779, %v783
      %v786 = vadd.f32 %v770, %v784
      %v787 = vadd.f32 %v771, %v784
      %v788 = vadd.f32 %v772, %v784
      %v789 = vadd.f32 %v773, %v784
      %v794 = vunpack.c.l.b16 %v774
      %v795 = vunpack.c.l.b16 %v775
      %v796 = vunpack.c.l.b16 %v776
      %v797 = vunpack.c.l.b16 %v777
      %v798 = vpack.c.b16 %v795, %v794
      %v799 = vpack.c.b16 %v797, %v796
      %800 = vrot.lane.b32.xlu0 %v784, 124
      %v801 = vpop.permute.xlu0 %800
      %vm803 = vcmask 31744
      %v805 = vsel %vm803, %v798, 0
      %v808 = vsel %vm803, %v799, 0
      %vm810 = vcmask 1041408
      %v812 = vsel %vm810, %v778, 0
      %814 = vmatprep.subr.bf16.mxu0 0
      %815 = vmatpush1.bf16.msra.mxu0 %v812
      %816 = vmatprep.subr.bf16.mxu0 0
      %817 = vmatpush1.bf16.msra.mxu0 0
      %818 = vmatprep.subr.bf16.mxu0 0
      %819 = vmatpush1.bf16.msra.mxu0 0
      %820 = vmatprep.subr.bf16.mxu0 0
      %821 = vmatpush1.bf16.msra.mxu0 0
      %822 = vmatprep.subr.bf16.mxu0 0
      %823 = vmatpush1.bf16.msra.mxu0 0
      %824 = vmatprep.subr.bf16.mxu0 0
      %825 = vmatpush1.bf16.msra.mxu0 0
      %826 = vmatprep.subr.bf16.mxu0 0
      %827 = vmatpush1.bf16.msra.mxu0 0
      %828 = vmatprep.subr.bf16.mxu0 0
      %829 = vmatpush1.bf16.msra.mxu0 0
      %830 = vmatprep.subr.bf16.mxu0 0
      %831 = vmatpush1.bf16.msra.mxu0 0
      %832 = vmatprep.subr.bf16.mxu0 0
      %833 = vmatpush1.bf16.msra.mxu0 0
      %834 = vmatprep.subr.bf16.mxu0 0
      %835 = vmatpush1.bf16.msra.mxu0 0
      %836 = vmatprep.subr.bf16.mxu0 0
      %837 = vmatpush1.bf16.msra.mxu0 0
      %838 = vmatprep.subr.bf16.mxu0 0
      %839 = vmatpush1.bf16.msra.mxu0 0
      %840 = vmatprep.subr.bf16.mxu0 0
      %841 = vmatpush1.bf16.msra.mxu0 0
      %842 = vmatprep.subr.bf16.mxu0 0
      %843 = vmatpush1.bf16.msra.mxu0 0
      %844 = vmatprep.subr.bf16.mxu0 0
      %845 = vmatpush1.bf16.msra.mxu0 0
      %846 = vmatprep.mubr.bf16.mxu0 0
      %847 = vmatmul.mubr.bf16.gmra.mrb[0].mxu0 %v805
      %v848 = vpop.f32.mrb[0].mxu0
      %v849 = vadd.f32 %v801, %v848
      %v850 = vpop.f32.mrb[0].mxu0
      %v851 = vpop.f32.mrb[0].mxu0
      %v852 = vadd.f32 %v801, %v851
      %v853 = vpop.f32.mrb[0].mxu0
      %854 = vmatprep.mubr.bf16.mxu0 0
      %855 = vmatmul.mubr.bf16.gmra.mrb[0].mxu0 %v808
      %v856 = vpop.f32.mrb[0].mxu0
      %v857 = vadd.f32 %v801, %v856
      %v858 = vpop.f32.mrb[0].mxu0
      %v859 = vpop.f32.mrb[0].mxu0
      %v860 = vadd.f32 %v801, %v859
      %v861 = vpop.f32.mrb[0].mxu0
      %862 = vdwg.mxu0
      %867 = vrot.lane.b32.xlu0 %v849, 4
      %v868 = vpop.permute.xlu0 %867
      %869 = vrot.lane.b32.xlu0 %v852, 4
      %v870 = vpop.permute.xlu0 %869
      %871 = vrot.lane.b32.xlu0 %v857, 4
      %v872 = vpop.permute.xlu0 %871
      %873 = vrot.lane.b32.xlu0 %v860, 4
      %v874 = vpop.permute.xlu0 %873
      %v879 = vsel %vm803, %v786, %v868
      %v880 = vsel %vm803, %v787, %v870
      %v881 = vsel %vm803, %v788, %v872
      %v882 = vsel %vm803, %v789, %v874
      %v883 = vxor.u32 %v879, 2147483648
      %v884 = vxor.u32 %v880, 2147483648
      %v885 = vxor.u32 %v881, 2147483648
      %v886 = vxor.u32 %v882, 2147483648
      %v887 = vmul.f32 %v883, 1.442695
      %v888 = vpow.pop %v887
      %v889 = vmul.f32 %v884, 1.442695
      %v890 = vpow.pop %v889
      %v891 = vmul.f32 %v885, 1.442695
      %v892 = vpow.pop %v891
      %v893 = vmul.f32 %v886, 1.442695
      %v894 = vpow.pop %v893
      %v895 = vadd.f32 %v888, 1.0
      %v896 = vadd.f32 %v890, 1.0
      %v897 = vadd.f32 %v892, 1.0
      %v898 = vadd.f32 %v894, 1.0
      %v899 = vrcp.pop %v895
      %v900 = vmul.f32 1.0, %v899
      %v901 = vrcp.pop %v896
      %v902 = vmul.f32 1.0, %v901
      %v903 = vrcp.pop %v897
      %v904 = vmul.f32 1.0, %v903
      %v905 = vrcp.pop %v898
      %v906 = vmul.f32 1.0, %v905
      %v907 = vmul.f32 %v879, %v900
      %v908 = vmul.f32 %v880, %v902
      %v909 = vmul.f32 %v881, %v904
      %v910 = vmul.f32 %v882, %v906
      %v911 = vpack.c.bf16 %v907, %v907
      %v912 = vpack.c.bf16 %v908, %v908
      %v913 = vpack.c.bf16 %v909, %v909
      %v914 = vpack.c.bf16 %v910, %v910
      %vm915 = vcmask 60416
      %916 = vst.msk [vmem:[%s401] sm:$0xf] %vm915, %v911
      %917 = vst.msk [vmem:[%s401 + $0x4] sm:$0xf] %vm915, %v912
      %918 = vst.msk [vmem:[%s401 + $0x8] sm:$0xf] %vm915, %v913
      %919 = vst.msk [vmem:[%s401 + $0xc] sm:$0xf] %vm915, %v914
      %s920 = smul.u32 4, %s22
      %p921 = scmp.lt.s32.totalorder %s21, 1
      %s922 = scalar_select %p921, %s21, 1
      %p923 = scmp.lt.s32.totalorder %s920, 7
      %s924 = scalar_select %p923, %s920, 7
      %s925 = smul.addr %s922, 8
      %s926 = sadd.s32 %s924, %s925
      %s927 = smul.addr %s926, 4
      %s928 = scalar_lea.vmem %s6, %s927
      // Predicated region
      $region45: #{adown_forward.1} parent=43 // pred_check
        %p929 = pneg %p200
      $region46: #{adown_forward.1} parent=43 // pred_check_branch
        %931 = sbr.rel (%p929) target = $region48
      $region47: #{adown_forward.1} parent=43 // pred_region
        %s932 = smul.u32 4, %s22
      $region48: #{adown_forward.1} parent=43 // pred_fallthru
        _
    $region44: #{adown_forward.1} parent=5 // pred_fallthru
      _
    %p933 = scmp.le.s32.totalorder 2, %s12
    // Predicated region
    $region49: #{adown_forward.1} parent=5 // pred_check
      %p934 = pneg %p933
    $region50: #{adown_forward.1} parent=5 // pred_check_branch
      %936 = sbr.rel (%p934) target = $region52
    $region51: #{adown_forward.1} parent=5 // pred_region
      %s937 = ssub.s32 %s12, 2
      // Predicated region
      $region53: #{adown_forward.1} parent=51 // pred_check
        %p938 = pneg %p206
      $region54: #{adown_forward.1} parent=51 // pred_check_branch
        %940 = sbr.rel (%p938) target = $region56
      $region55: #{adown_forward.1} parent=51 // pred_region
        %s941 = smul.u32 4, %s24
        %p942 = scmp.lt.s32.totalorder %s23, 1
        %s943 = scalar_select %p942, %s23, 1
        %p944 = scmp.lt.s32.totalorder %s941, 7
        %s945 = scalar_select %p944, %s941, 7
        %s946 = smul.addr %s943, 8
        %s947 = sadd.s32 %s945, %s946
        %s948 = smul.addr %s947, 4
        %s949 = scalar_lea.vmem %s6, %s948
      $region56: #{adown_forward.1} parent=51 // pred_fallthru
        _
    $region52: #{adown_forward.1} parent=5 // pred_fallthru
      _
  $region6: #{adown_forward.1} parent=0 // loop_footer
    %s16 = sadd.s32 1, %s12
  $region7: #{adown_forward.1} parent=0 // loop_footer_branch
    %11 = sbr.rel target = $region3
  $region8: #{adown_forward.1} parent=0 // loop_exit
    _

</llo_original>
